<compile_context>
chip_gen: v7x
topology: tpu7x:2x2x1
jax: 0.10.0
libtpu: 0.0.40
codegen_flags: <defaults>
</compile_context>

<pallas_src>
import functools

import jax
import jax.numpy as jnp
from jax.experimental import pallas as pl
from jax.experimental.pallas import tpu as pltpu


def _infonce_kernel(q_ref, kj_ref, ki_ref, out_ref,
                    colsum_ref, rowsum_ref, acc_ref,
                    *, temperature, n_total):
    i = pl.program_id(0)            # q-row tile index (outer)
    j = pl.program_id(1)            # k-row tile index (inner, reduction)
    ni = pl.num_programs(0)
    nj = pl.num_programs(1)
    inv_t = 1.0 / temperature

    @pl.when(jnp.logical_and(i == 0, j == 0))
    def _init_scalars():
        acc_ref[0] = jnp.float32(0.0)   # sum_r log(sum_c exp((sim_rc - 1)/T))
        acc_ref[1] = jnp.float32(0.0)   # sum of diagonal (positive) similarities
        acc_ref[2] = jnp.float32(0.0)   # sum of all similarities

    @pl.when(i == 0)
    def _init_colsum():
        colsum_ref[j] = jnp.zeros(colsum_ref.shape[1:], colsum_ref.dtype)

    @pl.when(j == 0)
    def _init_rowsum():
        rowsum_ref[...] = jnp.zeros_like(rowsum_ref)

    q = q_ref[...]
    kj = kj_ref[...]
    qn = q * jax.lax.rsqrt(jnp.sum(q * q, axis=-1, keepdims=True))
    kjn = kj * jax.lax.rsqrt(jnp.sum(kj * kj, axis=-1, keepdims=True))

    # (tq, tk) cosine similarities; NT matmul on the MXU (no transpose of kjn).
    sim = jax.lax.dot_general(qn, kjn, (((1,), (1,)), ((), ())),
                              preferred_element_type=jnp.float32)

    # Shifted exponentials: sim <= 1 so every exponent is <= 0.
    e = jnp.exp((sim - 1.0) * inv_t)
    rowsum_ref[...] += jnp.sum(e, axis=-1, keepdims=True)      # (tq, 1)
    colsum_ref[j] += jnp.sum(e, axis=0, keepdims=True)         # (1, tk)
    acc_ref[2] += jnp.sum(sim)

    @pl.when(j == 0)
    def _positives():
        # Rows [i*tq, (i+1)*tq) of k are the positives for this q tile.
        ki = ki_ref[...]
        kin = ki * jax.lax.rsqrt(jnp.sum(ki * ki, axis=-1, keepdims=True))
        diag = jnp.sum(qn * kin, axis=-1, keepdims=True)        # (tq, 1)
        acc_ref[1] += jnp.sum(diag)

    @pl.when(j == nj - 1)
    def _row_logsumexp():
        # Row sums for this q tile are complete: fold in their logs.
        acc_ref[0] += jnp.sum(jnp.log(rowsum_ref[...]))

    @pl.when(jnp.logical_and(i == ni - 1, j == nj - 1))
    def _finalize():
        n_f = jnp.float32(n_total)
        sum_log_row = acc_ref[0]
        sum_diag = acc_ref[1]
        sum_sim = acc_ref[2]
        sum_log_col = jnp.sum(jnp.log(colsum_ref[...]))
        # log(true row/col sums of exp(sim/T)) = log(shifted sums) + 1/T.
        loss_qk = sum_log_row + n_f * inv_t - inv_t * sum_diag   # sum over rows
        loss_kq = sum_log_col + n_f * inv_t - inv_t * sum_diag   # sum over cols
        out_ref[0] = 0.5 * (loss_qk + loss_kq) / n_f
        out_ref[1] = sum_diag / n_f
        out_ref[2] = (sum_sim - sum_diag) / (n_f * (n_f - 1.0))


def _pick_tile(n, candidates):
    for t in candidates:
        if t <= n and n % t == 0:
            return t
    raise ValueError(f"no tile in {candidates} divides N={n}")


def infonce(inputs_q, inputs_k, temperature=0.1, *, tq=None, tk=None):
    n, c = inputs_q.shape
    assert inputs_k.shape == (n, c)
    assert n % 8 == 0, "N must be a multiple of 8 (TPU sublane)"
    # TODO(synk): pad N to a multiple of 8 with masked rows instead of asserting.
    if tq is None:
        tq = _pick_tile(n, (256, 128, 64, 32, 16, 8))
    if tk is None:
        tk = _pick_tile(n, (512, 256, 128, 64, 32, 16, 8))
    ni, nk = n // tq, n // tk

    kernel = functools.partial(_infonce_kernel,
                               temperature=float(temperature), n_total=n)
    grid_spec = pltpu.PrefetchScalarGridSpec(
        num_scalar_prefetch=0,
        grid=(ni, nk),
        in_specs=[
            pl.BlockSpec((tq, c), lambda i, j: (i, 0)),   # q tile
            pl.BlockSpec((tk, c), lambda i, j: (j, 0)),   # k tile (reduction)
            pl.BlockSpec((tq, c), lambda i, j: (i, 0)),   # k rows for positives
        ],
        out_specs=pl.BlockSpec(memory_space=pltpu.MemorySpace.SMEM),
        scratch_shapes=[
            pltpu.VMEM((nk, 1, tk), jnp.float32),   # per-column exp sums
            pltpu.VMEM((tq, 1), jnp.float32),       # per-row exp sums (current q tile)
            pltpu.SMEM((3,), jnp.float32),          # scalar accumulators
        ],
    )
    out = pl.pallas_call(
        kernel,
        out_shape=jax.ShapeDtypeStruct((3,), jnp.float32),
        grid_spec=grid_spec,
        # Both axes accumulate into shared scratch, so both are "arbitrary".
        # TODO(synk): shard the q-tile axis across v7x's 2 TensorCores with a
        # cross-core reduction of the accumulators.
        compiler_params=pltpu.CompilerParams(
            dimension_semantics=("arbitrary", "arbitrary")),
    )(inputs_q, inputs_k, inputs_k)
    return out[0], out[1], out[2]


def _infonce_reference(q, k, temperature=0.1):
    # Pure-JAX mirror of the PyTorch forward (both directions).
    def single(a, b):
        an = a / jnp.linalg.norm(a, axis=1, keepdims=True)
        bn = b / jnp.linalg.norm(b, axis=1, keepdims=True)
        sim = an @ bn.T
        n = a.shape[0]
        eye = jnp.eye(n, dtype=bool)
        pos = sim[jnp.arange(n), jnp.arange(n)]
        neg = sim[~eye]
        loss = -jnp.log(jnp.exp(pos / temperature)
                        / jnp.exp(sim / temperature).sum(axis=-1))
        return loss.mean(), pos.mean(), neg.mean()

    l1, p1, n1 = single(q, k)
    l2, p2, n2 = single(k, q)
    return 0.5 * (l1 + l2), 0.5 * (p1 + p2), 0.5 * (n1 + n2)


if __name__ == "__main__":
    key = jax.random.PRNGKey(0)
    kq, kk = jax.random.split(key)
    N, C = 64, 128
    inputs_q = jax.random.normal(kq, (N, C), dtype=jnp.float32)
    inputs_k = jax.random.normal(kk, (N, C), dtype=jnp.float32)

    # Small explicit tiles so the demo exercises the full (q-tile x k-tile)
    # accumulation grid (4 x 4 grid points) rather than a single tile.
    loss, mean_pos, mean_neg = infonce(inputs_q, inputs_k, temperature=0.1,
                                       tq=16, tk=16)
    jax.block_until_ready((loss, mean_pos, mean_neg))

    ref_loss, ref_pos, ref_neg = _infonce_reference(inputs_q, inputs_k, 0.1)
    assert jnp.allclose(loss, ref_loss, atol=1e-4, rtol=1e-4), (loss, ref_loss)
    assert jnp.allclose(mean_pos, ref_pos, atol=1e-5, rtol=1e-5), (mean_pos, ref_pos)
    assert jnp.allclose(mean_neg, ref_neg, atol=1e-5, rtol=1e-5), (mean_neg, ref_neg)

    print("KERNEL_OK")
</pallas_src>

<mosaic_0001>
module attributes {stable_mosaic.version = 11 : i64} {
  func.func @_infonce_kernel(%arg0: i32, %arg1: i32, %arg2: memref<16x128xf32, #tpu.memory_space<vmem>>, %arg3: memref<16x128xf32, #tpu.memory_space<vmem>>, %arg4: memref<16x128xf32, #tpu.memory_space<vmem>>, %arg5: memref<3xf32, #tpu.memory_space<smem>>, %arg6: memref<4x1x16xf32, #tpu.memory_space<vmem>>, %arg7: memref<16x1xf32, #tpu.memory_space<vmem>>, %arg8: memref<3xf32, #tpu.memory_space<smem>>) attributes {dimension_semantics = [#tpu.dimension_semantics<arbitrary>, #tpu.dimension_semantics<arbitrary>], iteration_bounds = array<i64: 4, 4>, scalar_prefetch = 0 : i64, scratch_operands = 3 : i64, tpu.core_type = #tpu.core_type<tc>, window_params = [{transform_indices = @transform_0, window_bounds = array<i64: 16, 128>}, {transform_indices = @transform_1, window_bounds = array<i64: 16, 128>}, {transform_indices = @transform_2, window_bounds = array<i64: 16, 128>}, {transform_indices = @transform_3, window_bounds = array<i64: 3>}]} {
    %c0_i32 = arith.constant 0 : i32
    %0 = arith.cmpi eq, %arg0, %c0_i32 : i32
    %c0_i32_0 = arith.constant 0 : i32
    %1 = arith.cmpi eq, %arg1, %c0_i32_0 : i32
    %2 = arith.andi %0, %1 : i1
    %3 = arith.extui %2 : i1 to i32
    %c0_i32_1 = arith.constant 0 : i32
    %4 = arith.cmpi ne, %3, %c0_i32_1 : i32
    scf.if %4 {
      %cst_31 = arith.constant 0.000000e+00 : f32
      %c0_32 = arith.constant 0 : index
      %64 = memref.load %arg8[%c0_32] : memref<3xf32, #tpu.memory_space<smem>>
      memref.store %cst_31, %arg8[%c0_32] : memref<3xf32, #tpu.memory_space<smem>>
      %cst_33 = arith.constant 0.000000e+00 : f32
      %c1 = arith.constant 1 : index
      %65 = memref.load %arg8[%c1] : memref<3xf32, #tpu.memory_space<smem>>
      memref.store %cst_33, %arg8[%c1] : memref<3xf32, #tpu.memory_space<smem>>
      %cst_34 = arith.constant 0.000000e+00 : f32
      %c2_35 = arith.constant 2 : index
      %66 = memref.load %arg8[%c2_35] : memref<3xf32, #tpu.memory_space<smem>>
      memref.store %cst_34, %arg8[%c2_35] : memref<3xf32, #tpu.memory_space<smem>>
    } else {
    }
    %c0_i32_2 = arith.constant 0 : i32
    %5 = arith.cmpi eq, %arg0, %c0_i32_2 : i32
    %6 = arith.extui %5 : i1 to i32
    %c0_i32_3 = arith.constant 0 : i32
    %7 = arith.cmpi ne, %6, %c0_i32_3 : i32
    scf.if %7 {
      %cst_31 = arith.constant 0.000000e+00 : f32
      %64 = vector.broadcast %cst_31 : f32 to vector<1x16xf32>
      %65 = arith.index_cast %arg1 : i32 to index
      %c0_32 = arith.constant 0 : index
      %c0_33 = arith.constant 0 : index
      %66 = vector.load %arg6[%65, %c0_32, %c0_33] : memref<4x1x16xf32, #tpu.memory_space<vmem>>, vector<1x1x16xf32>
      %67 = vector.shape_cast %66 : vector<1x1x16xf32> to vector<1x16xf32>
      %68 = vector.shape_cast %64 : vector<1x16xf32> to vector<1x1x16xf32>
      tpu.vector_store %arg6[%65, %c0_32, %c0_33], %68 {strides = array<i32>} : memref<4x1x16xf32, #tpu.memory_space<vmem>>, vector<1x1x16xf32>,
    } else {
    }
    %c0_i32_4 = arith.constant 0 : i32
    %8 = arith.cmpi eq, %arg1, %c0_i32_4 : i32
    %9 = arith.extui %8 : i1 to i32
    %c0_i32_5 = arith.constant 0 : i32
    %10 = arith.cmpi ne, %9, %c0_i32_5 : i32
    scf.if %10 {
      %cst_31 = arith.constant 0.000000e+00 : f32
      %64 = vector.broadcast %cst_31 : f32 to vector<16x1xf32>
      %c0_32 = arith.constant 0 : index
      %c0_33 = arith.constant 0 : index
      %65 = vector.load %arg7[%c0_32, %c0_33] : memref<16x1xf32, #tpu.memory_space<vmem>>, vector<16x1xf32>
      tpu.vector_store %arg7[%c0_32, %c0_33], %64 {strides = array<i32>} : memref<16x1xf32, #tpu.memory_space<vmem>>, vector<16x1xf32>,
    } else {
    }
    %c0 = arith.constant 0 : index
    %c0_6 = arith.constant 0 : index
    %11 = vector.load %arg2[%c0, %c0_6] : memref<16x128xf32, #tpu.memory_space<vmem>>, vector<16x128xf32>
    %c0_7 = arith.constant 0 : index
    %c0_8 = arith.constant 0 : index
    %12 = vector.load %arg3[%c0_7, %c0_8] : memref<16x128xf32, #tpu.memory_space<vmem>>, vector<16x128xf32>
    %13 = arith.mulf %11, %11 : vector<16x128xf32>
    %cst = arith.constant dense<0.000000e+00> : vector<16xf32>
    %14 = vector.multi_reduction <add>, %13, %cst [1] : vector<16x128xf32> to vector<16xf32>
    %15 = vector.shape_cast %14 : vector<16xf32> to vector<16x1xf32>
    %16 = math.rsqrt %15 : vector<16x1xf32>
    %17 = vector.broadcast %16 : vector<16x1xf32> to vector<16x128xf32>
    %18 = arith.mulf %11, %17 : vector<16x128xf32>
    %19 = arith.mulf %12, %12 : vector<16x128xf32>
    %cst_9 = arith.constant dense<0.000000e+00> : vector<16xf32>
    %20 = vector.multi_reduction <add>, %19, %cst_9 [1] : vector<16x128xf32> to vector<16xf32>
    %21 = vector.shape_cast %20 : vector<16xf32> to vector<16x1xf32>
    %22 = math.rsqrt %21 : vector<16x1xf32>
    %23 = vector.broadcast %22 : vector<16x1xf32> to vector<16x128xf32>
    %24 = arith.mulf %12, %23 : vector<16x128xf32>
    %cst_10 = arith.constant dense<0.000000e+00> : vector<16x16xf32>
    %25 = tpu.matmul %18, %24, %cst_10 {dimension_numbers = #tpu.dot_dimension_numbers<[1], [1], [0], [0], [0, 0, 1, 0], [], []>} : vector<16x128xf32>, vector<16x128xf32>, vector<16x16xf32> -> vector<16x16xf32>
    %cst_11 = arith.constant 1.000000e+00 : f32
    %26 = vector.broadcast %cst_11 : f32 to vector<16x16xf32>
    %27 = arith.subf %25, %26 : vector<16x16xf32>
    %cst_12 = arith.constant 1.000000e+01 : f32
    %28 = vector.broadcast %cst_12 : f32 to vector<16x16xf32>
    %29 = arith.mulf %27, %28 : vector<16x16xf32>
    %30 = math.exp %29 : vector<16x16xf32>
    %c0_13 = arith.constant 0 : index
    %c0_14 = arith.constant 0 : index
    %31 = vector.load %arg7[%c0_13, %c0_14] : memref<16x1xf32, #tpu.memory_space<vmem>>, vector<16x1xf32>
    %cst_15 = arith.constant dense<0.000000e+00> : vector<16xf32>
    %32 = vector.multi_reduction <add>, %30, %cst_15 [1] : vector<16x16xf32> to vector<16xf32>
    %33 = vector.shape_cast %32 : vector<16xf32> to vector<16x1xf32>
    %34 = arith.addf %31, %33 : vector<16x1xf32>
    %c0_16 = arith.constant 0 : index
    %c0_17 = arith.constant 0 : index
    %35 = vector.load %arg7[%c0_16, %c0_17] : memref<16x1xf32, #tpu.memory_space<vmem>>, vector<16x1xf32>
    tpu.vector_store %arg7[%c0_16, %c0_17], %34 {strides = array<i32>} : memref<16x1xf32, #tpu.memory_space<vmem>>, vector<16x1xf32>,
    %36 = arith.index_cast %arg1 : i32 to index
    %c0_18 = arith.constant 0 : index
    %c0_19 = arith.constant 0 : index
    %37 = vector.load %arg6[%36, %c0_18, %c0_19] : memref<4x1x16xf32, #tpu.memory_space<vmem>>, vector<1x1x16xf32>
    %38 = vector.shape_cast %37 : vector<1x1x16xf32> to vector<1x16xf32>
    %cst_20 = arith.constant dense<0.000000e+00> : vector<16xf32>
    %39 = vector.multi_reduction <add>, %30, %cst_20 [0] : vector<16x16xf32> to vector<16xf32>
    %40 = vector.shape_cast %39 : vector<16xf32> to vector<1x16xf32>
    %41 = arith.addf %38, %40 : vector<1x16xf32>
    %42 = arith.index_cast %arg1 : i32 to index
    %c0_21 = arith.constant 0 : index
    %c0_22 = arith.constant 0 : index
    %43 = vector.load %arg6[%42, %c0_21, %c0_22] : memref<4x1x16xf32, #tpu.memory_space<vmem>>, vector<1x1x16xf32>
    %44 = vector.shape_cast %43 : vector<1x1x16xf32> to vector<1x16xf32>
    %45 = vector.shape_cast %41 : vector<1x16xf32> to vector<1x1x16xf32>
    tpu.vector_store %arg6[%42, %c0_21, %c0_22], %45 {strides = array<i32>} : memref<4x1x16xf32, #tpu.memory_space<vmem>>, vector<1x1x16xf32>,
    %c2 = arith.constant 2 : index
    %46 = memref.load %arg8[%c2] : memref<3xf32, #tpu.memory_space<smem>>
    %47 = vector.shape_cast %25 : vector<16x16xf32> to vector<1x16x16xf32>
    %cst_23 = arith.constant dense<0.000000e+00> : vector<1xf32>
    %48 = vector.multi_reduction <add>, %47, %cst_23 [1, 2] : vector<1x16x16xf32> to vector<1xf32>
    %49 = vector.shape_cast %48 : vector<1xf32> to vector<1x1x1xf32>
    %50 = vector.extract %49[0, 0, 0] : f32 from vector<1x1x1xf32>
    %51 = arith.addf %46, %50 : f32
    %c2_24 = arith.constant 2 : index
    %52 = memref.load %arg8[%c2_24] : memref<3xf32, #tpu.memory_space<smem>>
    memref.store %51, %arg8[%c2_24] : memref<3xf32, #tpu.memory_space<smem>>
    %c0_i32_25 = arith.constant 0 : i32
    %53 = arith.cmpi eq, %arg1, %c0_i32_25 : i32
    %54 = arith.extui %53 : i1 to i32
    %c0_i32_26 = arith.constant 0 : i32
    %55 = arith.cmpi ne, %54, %c0_i32_26 : i32
    scf.if %55 {
      %c0_31 = arith.constant 0 : index
      %c0_32 = arith.constant 0 : index
      %64 = vector.load %arg4[%c0_31, %c0_32] : memref<16x128xf32, #tpu.memory_space<vmem>>, vector<16x128xf32>
      %65 = arith.mulf %64, %64 : vector<16x128xf32>
      %cst_33 = arith.constant dense<0.000000e+00> : vector<16xf32>
      %66 = vector.multi_reduction <add>, %65, %cst_33 [1] : vector<16x128xf32> to vector<16xf32>
      %67 = vector.shape_cast %66 : vector<16xf32> to vector<16x1xf32>
      %68 = math.rsqrt %67 : vector<16x1xf32>
      %69 = vector.broadcast %68 : vector<16x1xf32> to vector<16x128xf32>
      %70 = arith.mulf %64, %69 : vector<16x128xf32>
      %71 = arith.mulf %18, %70 : vector<16x128xf32>
      %cst_34 = arith.constant dense<0.000000e+00> : vector<16xf32>
      %72 = vector.multi_reduction <add>, %71, %cst_34 [1] : vector<16x128xf32> to vector<16xf32>
      %73 = vector.shape_cast %72 : vector<16xf32> to vector<16x1xf32>
      %c1 = arith.constant 1 : index
      %74 = memref.load %arg8[%c1] : memref<3xf32, #tpu.memory_space<smem>>
      %75 = vector.shape_cast %73 : vector<16x1xf32> to vector<1x16x1xf32>
      %cst_35 = arith.constant dense<0.000000e+00> : vector<1xf32>
      %76 = vector.multi_reduction <add>, %75, %cst_35 [1, 2] : vector<1x16x1xf32> to vector<1xf32>
      %77 = vector.shape_cast %76 : vector<1xf32> to vector<1x1x1xf32>
      %78 = vector.extract %77[0, 0, 0] : f32 from vector<1x1x1xf32>
      %79 = arith.addf %74, %78 : f32
      %c1_36 = arith.constant 1 : index
      %80 = memref.load %arg8[%c1_36] : memref<3xf32, #tpu.memory_space<smem>>
      memref.store %79, %arg8[%c1_36] : memref<3xf32, #tpu.memory_space<smem>>
    } else {
    }
    %c3_i32 = arith.constant 3 : i32
    %56 = arith.cmpi eq, %arg1, %c3_i32 : i32
    %57 = arith.extui %56 : i1 to i32
    %c0_i32_27 = arith.constant 0 : i32
    %58 = arith.cmpi ne, %57, %c0_i32_27 : i32
    scf.if %58 {
      %c0_31 = arith.constant 0 : index
      %64 = memref.load %arg8[%c0_31] : memref<3xf32, #tpu.memory_space<smem>>
      %c0_32 = arith.constant 0 : index
      %c0_33 = arith.constant 0 : index
      %65 = vector.load %arg7[%c0_32, %c0_33] : memref<16x1xf32, #tpu.memory_space<vmem>>, vector<16x1xf32>
      %66 = math.log %65 : vector<16x1xf32>
      %67 = vector.shape_cast %66 : vector<16x1xf32> to vector<1x16x1xf32>
      %cst_34 = arith.constant dense<0.000000e+00> : vector<1xf32>
      %68 = vector.multi_reduction <add>, %67, %cst_34 [1, 2] : vector<1x16x1xf32> to vector<1xf32>
      %69 = vector.shape_cast %68 : vector<1xf32> to vector<1x1x1xf32>
      %70 = vector.extract %69[0, 0, 0] : f32 from vector<1x1x1xf32>
      %71 = arith.addf %64, %70 : f32
      %c0_35 = arith.constant 0 : index
      %72 = memref.load %arg8[%c0_35] : memref<3xf32, #tpu.memory_space<smem>>
      memref.store %71, %arg8[%c0_35] : memref<3xf32, #tpu.memory_space<smem>>
    } else {
    }
    %c3_i32_28 = arith.constant 3 : i32
    %59 = arith.cmpi eq, %arg0, %c3_i32_28 : i32
    %c3_i32_29 = arith.constant 3 : i32
    %60 = arith.cmpi eq, %arg1, %c3_i32_29 : i32
    %61 = arith.andi %59, %60 : i1
    %62 = arith.extui %61 : i1 to i32
    %c0_i32_30 = arith.constant 0 : i32
    %63 = arith.cmpi ne, %62, %c0_i32_30 : i32
    scf.if %63 {
      %c0_31 = arith.constant 0 : index
      %64 = memref.load %arg8[%c0_31] : memref<3xf32, #tpu.memory_space<smem>>
      %c1 = arith.constant 1 : index
      %65 = memref.load %arg8[%c1] : memref<3xf32, #tpu.memory_space<smem>>
      %c2_32 = arith.constant 2 : index
      %66 = memref.load %arg8[%c2_32] : memref<3xf32, #tpu.memory_space<smem>>
      %c0_33 = arith.constant 0 : index
      %c0_34 = arith.constant 0 : index
      %c0_35 = arith.constant 0 : index
      %67 = vector.load %arg6[%c0_33, %c0_34, %c0_35] : memref<4x1x16xf32, #tpu.memory_space<vmem>>, vector<4x1x16xf32>
      %68 = math.log %67 : vector<4x1x16xf32>
      %69 = vector.shape_cast %68 : vector<4x1x16xf32> to vector<1x4x1x16xf32>
      %cst_36 = arith.constant dense<0.000000e+00> : vector<1xf32>
      %70 = vector.multi_reduction <add>, %69, %cst_36 [1, 2, 3] : vector<1x4x1x16xf32> to vector<1xf32>
      %71 = vector.shape_cast %70 : vector<1xf32> to vector<1x1x1x1xf32>
      %72 = vector.extract %71[0, 0, 0, 0] : f32 from vector<1x1x1x1xf32>
      %cst_37 = arith.constant 6.400000e+01 : f32
      %cst_38 = arith.constant 1.000000e+01 : f32
      %73 = arith.mulf %cst_37, %cst_38 : f32
      %74 = arith.addf %64, %73 : f32
      %cst_39 = arith.constant 1.000000e+01 : f32
      %75 = arith.mulf %cst_39, %65 : f32
      %76 = arith.subf %74, %75 : f32
      %cst_40 = arith.constant 6.400000e+01 : f32
      %cst_41 = arith.constant 1.000000e+01 : f32
      %77 = arith.mulf %cst_40, %cst_41 : f32
      %78 = arith.addf %72, %77 : f32
      %cst_42 = arith.constant 1.000000e+01 : f32
      %79 = arith.mulf %cst_42, %65 : f32
      %80 = arith.subf %78, %79 : f32
      %81 = arith.addf %76, %80 : f32
      %cst_43 = arith.constant 5.000000e-01 : f32
      %82 = arith.mulf %cst_43, %81 : f32
      %cst_44 = arith.constant 6.400000e+01 : f32
      %83 = arith.divf %82, %cst_44 : f32
      %c0_45 = arith.constant 0 : index
      %84 = memref.load %arg5[%c0_45] : memref<3xf32, #tpu.memory_space<smem>>
      memref.store %83, %arg5[%c0_45] : memref<3xf32, #tpu.memory_space<smem>>
      %cst_46 = arith.constant 6.400000e+01 : f32
      %85 = arith.divf %65, %cst_46 : f32
      %c1_47 = arith.constant 1 : index
      %86 = memref.load %arg5[%c1_47] : memref<3xf32, #tpu.memory_space<smem>>
      memref.store %85, %arg5[%c1_47] : memref<3xf32, #tpu.memory_space<smem>>
      %87 = arith.subf %66, %65 : f32
      %cst_48 = arith.constant 6.400000e+01 : f32
      %cst_49 = arith.constant 1.000000e+00 : f32
      %88 = arith.subf %cst_48, %cst_49 : f32
      %cst_50 = arith.constant 6.400000e+01 : f32
      %89 = arith.mulf %cst_50, %88 : f32
      %90 = arith.divf %87, %89 : f32
      %c2_51 = arith.constant 2 : index
      %91 = memref.load %arg5[%c2_51] : memref<3xf32, #tpu.memory_space<smem>>
      memref.store %90, %arg5[%c2_51] : memref<3xf32, #tpu.memory_space<smem>>
    } else {
    }
    return
  }
  func.func @transform_0(%arg0: i32, %arg1: i32) -> (i32, i32) {
    %c0_i32 = arith.constant 0 : i32
    %c0_i32_0 = arith.constant 0 : i32
    return %arg0, %c0_i32 : i32, i32
  }
  func.func @transform_1(%arg0: i32, %arg1: i32) -> (i32, i32) {
    %c0_i32 = arith.constant 0 : i32
    %c0_i32_0 = arith.constant 0 : i32
    return %arg1, %c0_i32 : i32, i32
  }
  func.func @transform_2(%arg0: i32, %arg1: i32) -> (i32, i32) {
    %c0_i32 = arith.constant 0 : i32
    %c0_i32_0 = arith.constant 0 : i32
    return %arg0, %c0_i32 : i32, i32
  }
  func.func @transform_3(%arg0: i32, %arg1: i32) -> i32 {
    %c0_i32 = arith.constant 0 : i32
    %c0_i32_0 = arith.constant 0 : i32
    return %c0_i32 : i32
  }
}

</mosaic_0001>

<llo_original>
// kernel: tpu_custom_call.1
$region0: #{tpu_custom_call.1}
  #allocation0 [shape = 'u32[]', space=smem, size = 0x4, offset = 0x4, fixed_abs, tag = 'smem constant byte address 0x4 - core index']
  #allocation1 [shape = 'u32[144,128]{1,0:T(1,128)}', space=vmem, size = 0x12000, scoped, tag = 'internal scratch']
  #allocation2 [shape = 'f32[4,1,16]{2,1,0:T(1,128)}', space=vmem, size = 0x800, scoped, tag = 'scratch operand']
  #allocation3 [shape = 'f32[16,1]{1,0:T(8,128)}', space=vmem, size = 0x2000, scoped, tag = 'scratch operand']
  #allocation4 [shape = 'f32[3]{0:T(128)}', space=smem, size = 0x200, scoped, tag = 'scratch operand']
  %s0 = inlined_call_operand.hbm [shape: f32[64,128], index: 0, kind: input, shape index: {}]
  %s1 = inlined_call_operand.hbm [shape: f32[64,128], index: 1, kind: input, shape index: {}]
  %s2 = inlined_call_operand.hbm [shape: f32[64,128], index: 2, kind: input, shape index: {}]
  %s3 = inlined_call_operand.hbm [shape: f32[3], index: 3, kind: output, shape index: {}]
  %s4 = sld [smem:[#allocation0]]
  $region81: #{tpu_custom_call.1} parent=0
    _
  %s6 = ssub.s32 1, %s4
  %s7 = scalar_select 0, %s6, %s4
  $region1: #{tpu_custom_call.1} parent=0
    #allocation5 [shape = 'u8[16384]{0}', space=vmem, size = 0x4000, scoped, tag = 'input window, operand 0']
    #allocation6 [shape = 's32[2]{0}', space=sflag, size = 0x8, scoped, tag = 'scoped memory for tpu_custom_call.1']
    #allocation7 [shape = 's32[2]{0}', space=sflag, size = 0x8, scoped, tag = 'scoped memory for tpu_custom_call.1']
    #allocation8 [shape = 'u8[16384]{0}', space=vmem, size = 0x4000, scoped, tag = 'input window, operand 1']
    #allocation9 [shape = 's32[2]{0}', space=sflag, size = 0x8, scoped, tag = 'scoped memory for tpu_custom_call.1']
    #allocation10 [shape = 'u8[16384]{0}', space=vmem, size = 0x4000, scoped, tag = 'input window, operand 2']
    #allocation11 [shape = 'u8[512]{0}', space=smem, size = 0x200, scoped, tag = 'output window, operand 0, single buffered']
    %8 = vsyncpa [#allocation6], 0
    %s9 = scalar_lea.sflag [#allocation6], 1
    %10 = vsyncpa %s9, 0
    %11 = vsyncpa [#allocation9], 0
    %s12 = scalar_lea.sflag [#allocation9], 1
    %13 = vsyncpa %s12, 0
    %14 = vsyncpa [#allocation7], 0
    loop: start=0, step=1, limit=18
    $region2: #{tpu_custom_call.1} parent=1 // loop_pre_header
      _
    $region3: #{tpu_custom_call.1} parent=1 // loop_header
      %s16 = sphi 0, %s20
      %p17 = scmp.ge.s32.totalorder %s16, 18
      %s23 = sphi 0, %s35
      %s24 = sphi 0, %s31
      %s25 = sphi 0, %s23
      %s26 = sphi 0, %s24
      %s27 = sphi 0, %s25
      %s28 = sphi 0, %s26
      %s38 = sphi 0, %s40
      %s41 = sphi 0, %s38
      %s42 = sphi 0, %s41
      %s58 = sphi 0, %s42
      %s64 = sphi 0, %s66
      %s67 = sphi 0, %s64
      %s68 = sphi 0, %s67
      %s84 = sphi 0, %s68
      %s90 = sphi 0, %s92
      %s93 = sphi 0, %s90
      %s94 = sphi 0, %s93
      %s110 = sphi 0, %s94
      %s114 = sphi 0, %s114
      %s116 = sphi 0, %s114
      %s117 = sphi 0, %s116
      %s131 = sphi 0, %s117
    $region4: #{tpu_custom_call.1} parent=1 // loop_header_branch
      %19 = sbr.rel (%p17) target = $region8
    $region5: #{tpu_custom_call.1} parent=1 // loop_body
      %s21 = ssub.s32 %s16, 1
      %s22 = ssub.s32 %s16, 2
      %s29 = sadd.s32 1, %s24
      %p30 = scmp.ge.s32.totalorder %s29, 4
      %s31 = scalar_select %p30, 0, %s29
      %s32 = sadd.s32 1, %s23
      %s33 = scalar_select %p30, %s32, %s23
      %p34 = scmp.ge.s32.totalorder %s33, 4
      %s35 = scalar_select %p34, 0, %s33
      %s36 = ssub.s32 %s23, %s35
      %p37 = scmp.eq.s32.totalorder %s36, 0
      %s39 = sadd.s32 %s38, 1
      %s40 = scalar_select %p37, %s38, %s39
      %p43 = pneg %p37
      %p44 = scmp.eq.s32.totalorder %s16, 15
      %p45 = por %p43, %p44
      %p46 = scmp.ne.s32.totalorder %s38, %s41
      %p47 = scmp.eq.s32.totalorder %s16, 0
      %p48 = por %p46, %p47
      %p49 = scmp.ne.s32.totalorder %s38, %s41
      %p50 = scmp.eq.s32.totalorder %s21, 15
      %p51 = por %p49, %p50
      %p52 = scmp.ne.s32.totalorder %s41, %s42
      %p53 = scmp.eq.s32.totalorder %s21, 0
      %p54 = por %p52, %p53
      %p55 = scmp.ne.s32.totalorder %s41, %s42
      %p56 = scmp.eq.s32.totalorder %s22, 15
      %p57 = por %p55, %p56
      %p59 = scmp.ne.s32.totalorder %s42, %s58
      %p60 = scmp.eq.s32.totalorder %s22, 0
      %p61 = por %p59, %p60
      %s62 = ssub.s32 %s24, %s31
      %p63 = scmp.eq.s32.totalorder %s62, 0
      %s65 = sadd.s32 %s64, 1
      %s66 = scalar_select %p63, %s64, %s65
      %p69 = pneg %p63
      %p70 = scmp.eq.s32.totalorder %s16, 15
      %p71 = por %p69, %p70
      %p72 = scmp.ne.s32.totalorder %s64, %s67
      %p73 = scmp.eq.s32.totalorder %s16, 0
      %p74 = por %p72, %p73
      %p75 = scmp.ne.s32.totalorder %s64, %s67
      %p76 = scmp.eq.s32.totalorder %s21, 15
      %p77 = por %p75, %p76
      %p78 = scmp.ne.s32.totalorder %s67, %s68
      %p79 = scmp.eq.s32.totalorder %s21, 0
      %p80 = por %p78, %p79
      %p81 = scmp.ne.s32.totalorder %s67, %s68
      %p82 = scmp.eq.s32.totalorder %s22, 15
      %p83 = por %p81, %p82
      %p85 = scmp.ne.s32.totalorder %s68, %s84
      %p86 = scmp.eq.s32.totalorder %s22, 0
      %p87 = por %p85, %p86
      %s88 = ssub.s32 %s23, %s35
      %p89 = scmp.eq.s32.totalorder %s88, 0
      %s91 = sadd.s32 %s90, 1
      %s92 = scalar_select %p89, %s90, %s91
      %p95 = pneg %p89
      %p96 = scmp.eq.s32.totalorder %s16, 15
      %p97 = por %p95, %p96
      %p98 = scmp.ne.s32.totalorder %s90, %s93
      %p99 = scmp.eq.s32.totalorder %s16, 0
      %p100 = por %p98, %p99
      %p101 = scmp.ne.s32.totalorder %s90, %s93
      %p102 = scmp.eq.s32.totalorder %s21, 15
      %p103 = por %p101, %p102
      %p104 = scmp.ne.s32.totalorder %s93, %s94
      %p105 = scmp.eq.s32.totalorder %s21, 0
      %p106 = por %p104, %p105
      %p107 = scmp.ne.s32.totalorder %s93, %s94
      %p108 = scmp.eq.s32.totalorder %s22, 15
      %p109 = por %p107, %p108
      %p111 = scmp.ne.s32.totalorder %s94, %s110
      %p112 = scmp.eq.s32.totalorder %s22, 0
      %p113 = por %p111, %p112
      %s115 = sadd.s32 %s114, 1
      %p118 = scmp.eq.s32.totalorder %s16, 15
      %p119 = scmp.ne.s32.totalorder %s114, %s116
      %p120 = scmp.eq.s32.totalorder %s16, 0
      %p121 = por %p119, %p120
      %p122 = scmp.ne.s32.totalorder %s114, %s116
      %p123 = scmp.eq.s32.totalorder %s21, 15
      %p124 = por %p122, %p123
      %p125 = scmp.ne.s32.totalorder %s116, %s117
      %p126 = scmp.eq.s32.totalorder %s21, 0
      %p127 = por %p125, %p126
      %p128 = scmp.ne.s32.totalorder %s116, %s117
      %p129 = scmp.eq.s32.totalorder %s22, 15
      %p130 = por %p128, %p129
      %p132 = scmp.ne.s32.totalorder %s117, %s131
      %p133 = scmp.eq.s32.totalorder %s22, 0
      %p134 = por %p132, %p133
      %p135 = scmp.le.s32.totalorder 1, %s16
      %p136 = scmp.lt.s32.totalorder %s16, 17
      %p137 = pnand %p135, %p136
      %p138 = pneg %p137
      // Predicated region
      $region9: #{tpu_custom_call.1} parent=5 // pred_check
        _
      $region10: #{tpu_custom_call.1} parent=5 // pred_check_branch
        %140 = sbr.rel (%p137) target = $region12
      $region11: #{tpu_custom_call.1} parent=5 // pred_region
        %s141 = ssub.s32 %s16, 1
      $region12: #{tpu_custom_call.1} parent=5 // pred_fallthru
        _
      %p142 = scmp.lt.s32.totalorder %s16, 16
      // Predicated region
      $region13: #{tpu_custom_call.1} parent=5 // pred_check
        %p143 = pneg %p142
      $region14: #{tpu_custom_call.1} parent=5 // pred_check_branch
        %145 = sbr.rel (%p143) target = $region16
      $region15: #{tpu_custom_call.1} parent=5 // pred_region
        // Predicated region
        $region17: #{tpu_custom_call.1} parent=15 // pred_check
          %p146 = pneg %p48
        $region18: #{tpu_custom_call.1} parent=15 // pred_check_branch
          %148 = sbr.rel (%p146) target = $region20
        $region19: #{tpu_custom_call.1} parent=15 // pred_region
          %s149 = sand.u32 %s38, 1
          %s150 = scalar_lea.sflag [#allocation6], %s149
          %s151 = sand.u32 %s38, 1
          %s152 = smul.addr %s151, 16
          %s153 = scalar_lea.vmem [#allocation5], %s152
          %s154 = smul.u32 2, %s23
          %s156 = ssub.s32 256, 256
          %157 = vsyncadd %s150, %s156
          %s158 = smul.addr %s154, 128
          %s159 = scalar_lea.hbm %s0, %s158
          %s160 = sshll.u32 %s153, 4
          %s161 = int_to_ptr.vmem [resolvable:$true] %s160
          %166 = dma.hbm_to_vmem [thread:$0]  %s159, 256, %s161, %s150, 128, 128, 8
        $region20: #{tpu_custom_call.1} parent=15 // pred_fallthru
          _
        // Predicated region
        $region21: #{tpu_custom_call.1} parent=15 // pred_check
          %p167 = pneg %p74
        $region22: #{tpu_custom_call.1} parent=15 // pred_check_branch
          %169 = sbr.rel (%p167) target = $region24
        $region23: #{tpu_custom_call.1} parent=15 // pred_region
          %s170 = sand.u32 %s16, 1
          %s171 = scalar_lea.sflag [#allocation9], %s170
          %s172 = sand.u32 %s64, 1
          %s173 = smul.addr %s172, 16
          %s174 = scalar_lea.vmem [#allocation8], %s173
          %s175 = smul.u32 2, %s24
          %s177 = ssub.s32 256, 256
          %178 = vsyncadd %s171, %s177
          %s179 = smul.addr %s175, 128
          %s180 = scalar_lea.hbm %s1, %s179
          %s181 = sshll.u32 %s174, 4
          %s182 = int_to_ptr.vmem [resolvable:$true] %s181
          %187 = dma.hbm_to_vmem [thread:$0]  %s180, 256, %s182, %s171, 128, 128, 8
        $region24: #{tpu_custom_call.1} parent=15 // pred_fallthru
          _
        // Predicated region
        $region25: #{tpu_custom_call.1} parent=15 // pred_check
          %p188 = pneg %p100
        $region26: #{tpu_custom_call.1} parent=15 // pred_check_branch
          %190 = sbr.rel (%p188) target = $region28
        $region27: #{tpu_custom_call.1} parent=15 // pred_region
          %s191 = sand.u32 %s16, 1
          %s192 = scalar_lea.sflag [#allocation9], %s191
          %s193 = sand.u32 %s90, 1
          %s194 = smul.addr %s193, 16
          %s195 = scalar_lea.vmem [#allocation10], %s194
          %s196 = smul.u32 2, %s23
          %s198 = ssub.s32 256, 256
          %199 = vsyncadd %s192, %s198
          %s200 = smul.addr %s196, 128
          %s201 = scalar_lea.hbm %s2, %s200
          %s202 = sshll.u32 %s195, 4
          %s203 = int_to_ptr.vmem [resolvable:$true] %s202
          %208 = dma.hbm_to_vmem [thread:$0]  %s201, 256, %s203, %s192, 128, 128, 8
        $region28: #{tpu_custom_call.1} parent=15 // pred_fallthru
          _
      $region16: #{tpu_custom_call.1} parent=5 // pred_fallthru
        _
      %p209 = scmp.le.s32.totalorder 1, %s16
      %p210 = scmp.lt.s32.totalorder %s16, 17
      %p211 = pnand %p209, %p210
      %p212 = pneg %p211
      // Predicated region
      $region29: #{tpu_custom_call.1} parent=5 // pred_check
        _
      $region30: #{tpu_custom_call.1} parent=5 // pred_check_branch
        %214 = sbr.rel (%p211) target = $region32
      $region31: #{tpu_custom_call.1} parent=5 // pred_region
        %s215 = ssub.s32 %s16, 1
        %s216 = sand.u32 %s41, 1
        %s217 = scalar_lea.sflag [#allocation6], %s216
        %s218 = sand.u32 %s41, 1
        %s219 = smul.addr %s218, 16
        %s220 = scalar_lea.vmem [#allocation5], %s219
        // Predicated region
        $region33: #{tpu_custom_call.1} parent=31 // pred_check
          %p221 = pneg %p54
        $region34: #{tpu_custom_call.1} parent=31 // pred_check_branch
          %223 = sbr.rel (%p221) target = $region36
        $region35: #{tpu_custom_call.1} parent=31 // pred_region
          %224 = dma.done %s217, 256
        $region36: #{tpu_custom_call.1} parent=31 // pred_fallthru
          _
        %s225 = sand.u32 %s21, 1
        %s226 = scalar_lea.sflag [#allocation9], %s225
        %s227 = sand.u32 %s67, 1
        %s228 = smul.addr %s227, 16
        %s229 = scalar_lea.vmem [#allocation8], %s228
        // Predicated region
        $region37: #{tpu_custom_call.1} parent=31 // pred_check
          %p230 = pneg %p80
        $region38: #{tpu_custom_call.1} parent=31 // pred_check_branch
          %232 = sbr.rel (%p230) target = $region40
        $region39: #{tpu_custom_call.1} parent=31 // pred_region
          %233 = dma.done %s226, 256
        $region40: #{tpu_custom_call.1} parent=31 // pred_fallthru
          _
        %s234 = sand.u32 %s21, 1
        %s235 = scalar_lea.sflag [#allocation9], %s234
        %s236 = sand.u32 %s93, 1
        %s237 = smul.addr %s236, 16
        %s238 = scalar_lea.vmem [#allocation10], %s237
        // Predicated region
        $region41: #{tpu_custom_call.1} parent=31 // pred_check
          %p239 = pneg %p106
        $region42: #{tpu_custom_call.1} parent=31 // pred_check_branch
          %241 = sbr.rel (%p239) target = $region44
        $region43: #{tpu_custom_call.1} parent=31 // pred_region
          %242 = dma.done %s235, 256
        $region44: #{tpu_custom_call.1} parent=31 // pred_fallthru
          _
        %s243 = sand.u32 %s41, 1
        %s244 = scalar_lea.sflag [#allocation6], %s243
        %s245 = sand.u32 %s41, 1
        %s246 = smul.addr %s245, 16
        %s247 = scalar_lea.vmem [#allocation5], %s246
        %p248 = pneg %p54
        %p249 = pneg %p51
        %s250 = sand.u32 %s21, 1
        %s251 = scalar_lea.sflag [#allocation9], %s250
        %s252 = sand.u32 %s67, 1
        %s253 = smul.addr %s252, 16
        %s254 = scalar_lea.vmem [#allocation8], %s253
        %p255 = pneg %p80
        %p256 = pneg %p77
        %s257 = sand.u32 %s21, 1
        %s258 = scalar_lea.sflag [#allocation9], %s257
        %s259 = sand.u32 %s93, 1
        %s260 = smul.addr %s259, 16
        %s261 = scalar_lea.vmem [#allocation10], %s260
        %p262 = pneg %p106
        %p263 = pneg %p103
        %p264 = pneg %p127
        %p265 = pneg %p124
        %s266 = smul.u32 2, %s25
        %s267 = smul.u32 2, %s26
        %s268 = smul.u32 2, %s25
        %p269 = scmp.eq.s32.totalorder %s25, 0
        %p270 = scmp.eq.s32.totalorder %s26, 0
        %p271 = pnand %p269, %p270
        %p272 = pneg %p271
        // Predicated region
        $region45: #{tpu_custom_call.1} parent=31 // pred_check
          _
        $region46: #{tpu_custom_call.1} parent=31 // pred_check_branch
          %274 = sbr.rel (%p271) target = $region48
        $region47: #{tpu_custom_call.1} parent=31 // pred_region
          %s275 = scalar_lea.smem [#allocation4], 0
          %276 = sst [smem:[%s275]] 0.0
          %s277 = scalar_lea.smem [#allocation4], 1
          %278 = sst [smem:[%s277]] 0.0
          %s279 = scalar_lea.smem [#allocation4], 2
          %280 = sst [smem:[%s279]] 0.0
        $region48: #{tpu_custom_call.1} parent=31 // pred_fallthru
          _
        // Predicated region
        $region49: #{tpu_custom_call.1} parent=31 // pred_check
          %p281 = pneg %p269
        $region50: #{tpu_custom_call.1} parent=31 // pred_check_branch
          %283 = sbr.rel (%p281) target = $region52
        $region51: #{tpu_custom_call.1} parent=31 // pred_region
          %s284 = scalar_lea.vmem [#allocation2], %s26
          %vm285 = vcmask 122880
          %286 = vst.msk [vmem:[%s284] sm:$0x1] %vm285, 0.0
        $region52: #{tpu_custom_call.1} parent=31 // pred_fallthru
          _
        // Predicated region
        $region53: #{tpu_custom_call.1} parent=31 // pred_check
          %p287 = pneg %p270
        $region54: #{tpu_custom_call.1} parent=31 // pred_check_branch
          %289 = sbr.rel (%p287) target = $region56
        $region55: #{tpu_custom_call.1} parent=31 // pred_region
          %vm290 = vcmask 7168
          %291 = vst.msk [vmem:[#allocation3] sm:$0xff] %vm290, 0.0
          %292 = vst.msk [vmem:[#allocation3 + $0x8] sm:$0xff] %vm290, 0.0
        $region56: #{tpu_custom_call.1} parent=31 // pred_fallthru
          _
        %v293 = vld [vmem:[%s220] sm:$0xff]
        %v294 = vld [vmem:[%s220 + $0x8] sm:$0xff]
        %v295 = vld [vmem:[%s229] sm:$0xff]
        %v296 = vld [vmem:[%s229 + $0x8] sm:$0xff]
        %v297 = vmul.f32 %v293, %v293
        %v298 = vmul.f32 %v294, %v294
        %299 = vadd.xlane.f32.xlu0 %v297
        %v300 = vpop.xlane.xlu0 %299
        %301 = vadd.xlane.f32.xlu0 %v298
        %v302 = vpop.xlane.xlu0 %301
        %v303 = vrsqrt.pop %v300
        %v304 = vrsqrt.pop %v302
        %v305 = vmul.f32 %v293, %v303
        %v306 = vmul.f32 %v294, %v304
        %v307 = vmul.f32 %v295, %v295
        %v308 = vmul.f32 %v296, %v296
        %309 = vadd.xlane.f32.xlu0 %v307
        %v310 = vpop.xlane.xlu0 %309
        %311 = vadd.xlane.f32.xlu0 %v308
        %v312 = vpop.xlane.xlu0 %311
        %v313 = vrsqrt.pop %v310
        %v314 = vrsqrt.pop %v312
        %v315 = vmul.f32 %v295, %v313
        %v316 = vmul.f32 %v296, %v314
        %317 = vmatprep.subr.mxu0 0.0
        %318 = vmatpush1.xpose.msra.mxu0 %v315
        %319 = vmatprep.subr.mxu0 0.0
        %320 = vmatpush1.xpose.msra.mxu0 %v316
        %321 = vmatprep.subr.mxu0 0.0
        %322 = vmatpush1.xpose.msra.mxu0 0.0
        %323 = vmatprep.subr.mxu0 0.0
        %324 = vmatpush1.xpose.msra.mxu0 0.0
        %325 = vmatprep.subr.mxu0 0.0
        %326 = vmatpush1.xpose.msra.mxu0 0.0
        %327 = vmatprep.subr.mxu0 0.0
        %328 = vmatpush1.xpose.msra.mxu0 0.0
        %329 = vmatprep.subr.mxu0 0.0
        %330 = vmatpush1.xpose.msra.mxu0 0.0
        %331 = vmatprep.subr.mxu0 0.0
        %332 = vmatpush1.xpose.msra.mxu0 0.0
        %333 = vmatprep.subr.mxu0 0.0
        %334 = vmatpush1.xpose.msra.mxu0 0.0
        %335 = vmatprep.subr.mxu0 0.0
        %336 = vmatpush1.xpose.msra.mxu0 0.0
        %337 = vmatprep.subr.mxu0 0.0
        %338 = vmatpush1.xpose.msra.mxu0 0.0
        %339 = vmatprep.subr.mxu0 0.0
        %340 = vmatpush1.xpose.msra.mxu0 0.0
        %341 = vmatprep.subr.mxu0 0.0
        %342 = vmatpush1.xpose.msra.mxu0 0.0
        %343 = vmatprep.subr.mxu0 0.0
        %344 = vmatpush1.xpose.msra.mxu0 0.0
        %345 = vmatprep.subr.mxu0 0.0
        %346 = vmatpush1.xpose.msra.mxu0 0.0
        %347 = vmatprep.subr.mxu0 0.0
        %348 = vmatpush1.xpose.msra.mxu0 0.0
        %349 = vmatprep.subr.mxu0 0.0
        %350 = vmatpush1.xpose.msra.mxu0 0.0
        %351 = vmatprep.subr.mxu0 0.0
        %352 = vmatpush1.xpose.msra.mxu0 0.0
        %353 = vmatprep.subr.mxu0 0.0
        %354 = vmatpush1.xpose.msra.mxu0 0.0
        %355 = vmatprep.subr.mxu0 0.0
        %356 = vmatpush1.xpose.msra.mxu0 0.0
        %357 = vmatprep.subr.mxu0 0.0
        %358 = vmatpush1.xpose.msra.mxu0 0.0
        %359 = vmatprep.subr.mxu0 0.0
        %360 = vmatpush1.xpose.msra.mxu0 0.0
        %361 = vmatprep.subr.mxu0 0.0
        %362 = vmatpush1.xpose.msra.mxu0 0.0
        %363 = vmatprep.subr.mxu0 0.0
        %364 = vmatpush1.xpose.msra.mxu0 0.0
        %365 = vmatprep.subr.mxu0 0.0
        %366 = vmatpush1.xpose.msra.mxu0 0.0
        %367 = vmatprep.subr.mxu0 0.0
        %368 = vmatpush1.xpose.msra.mxu0 0.0
        %369 = vmatprep.subr.mxu0 0.0
        %370 = vmatpush1.xpose.msra.mxu0 0.0
        %371 = vmatprep.subr.mxu0 0.0
        %372 = vmatpush1.xpose.msra.mxu0 0.0
        %373 = vmatprep.subr.mxu0 0.0
        %374 = vmatpush1.xpose.msra.mxu0 0.0
        %375 = vmatprep.subr.mxu0 0.0
        %376 = vmatpush1.xpose.msra.mxu0 0.0
        %377 = vmatprep.subr.mxu0 0.0
        %378 = vmatpush1.xpose.msra.mxu0 0.0
        %379 = vmatprep.subr.mxu0 0.0
        %380 = vmatpush1.xpose.msra.mxu0 0.0
        %381 = vmatprep.mubr.f32.mxu0 0.0
        %382 = vmatmul.mubr.f32.gmra.mrb[0].mxu0 %v305
        %v383 = vpop.f32.mrb[0].mxu0
        %v384 = vadd.f32 0.0, %v383
        %v385 = vpop.f32.mrb[0].mxu0
        %386 = vmatprep.mubr.f32.mxu0 0.0
        %387 = vmatmul.mubr.f32.gmra.mrb[0].mxu0 %v306
        %v388 = vpop.f32.mrb[0].mxu0
        %v389 = vadd.f32 0.0, %v388
        %v390 = vpop.f32.mrb[0].mxu0
        %391 = vdwg.mxu0
        %v392 = vsub.f32 %v384, 1.0
        %v393 = vsub.f32 %v389, 1.0
        %v394 = vmul.f32 %v392, 10.0
        %v395 = vmul.f32 %v393, 10.0
        %v396 = vmul.f32 %v394, 1.442695
        %v397 = vpow.pop %v396
        %v398 = vmul.f32 %v395, 1.442695
        %v399 = vpow.pop %v398
        %v400 = vld [vmem:[#allocation3] sm:$0xff]
        %v401 = vld [vmem:[#allocation3 + $0x8] sm:$0xff]
        %vm402 = vcmask 130048
        %v403 = vsel %vm402, %v397, 0.0
        %404 = vadd.xlane.f32.xlu0 %v403
        %v405 = vpop.xlane.xlu0 %404
        %v406 = vsel %vm402, %v399, 0.0
        %407 = vadd.xlane.f32.xlu0 %v406
        %v408 = vpop.xlane.xlu0 %407
        %v409 = vadd.f32 %v400, %v405
        %v410 = vadd.f32 %v401, %v408
        %vm411 = vcmask 7168
        %412 = vst.msk [vmem:[#allocation3] sm:$0xff] %vm411, %v409
        %413 = vst.msk [vmem:[#allocation3 + $0x8] sm:$0xff] %vm411, %v410
        %s414 = scalar_lea.vmem [#allocation2], %s26
        %v415 = vld [vmem:[%s414] sm:$0x1]
        %v416 = vadd.f32 %v403, %v406
        %v417 = vrot.slane %v416, 4
        %v418 = vadd.f32 %v416, %v417
        %v419 = vrot.slane %v418, 2
        %v420 = vadd.f32 %v418, %v419
        %v421 = vrot.slane %v420, 1
        %v422 = vadd.f32 %v420, %v421
        %v423 = vadd.f32 %v415, %v422
        %vm424 = vcmask 122880
        %425 = vst.msk [vmem:[%s414] sm:$0x1] %vm424, %v423
        %s426 = sld [smem:[#allocation4 + $0x2]]
        %v427 = vsel %vm402, %v384, 0.0
        %v428 = vsel %vm402, %v389, 0.0
        %v429 = vadd.f32 %v427, %v428
        %430 = vadd.xlane.f32.xlu0 %v429
        %v431 = vpop.xlane.xlu0 %430
        %v432 = vrot.slane %v431, 4
        %v433 = vadd.f32 %v431, %v432
        %v434 = vrot.slane %v433, 2
        %v435 = vadd.f32 %v433, %v434
        %v436 = vrot.slane %v435, 1
        %v437 = vadd.f32 %v435, %v436
        %s438 = vtos %v437
        %s439 = sadd.f32 %s426, %s438
        %s440 = scalar_lea.smem [#allocation4], 2
        %441 = sst [smem:[%s440]] %s439
        // Predicated region
        $region57: #{tpu_custom_call.1} parent=31 // pred_check
          %p442 = pneg %p270
        $region58: #{tpu_custom_call.1} parent=31 // pred_check_branch
          %444 = sbr.rel (%p442) target = $region60
        $region59: #{tpu_custom_call.1} parent=31 // pred_region
          %v445 = vld [vmem:[%s238] sm:$0xff]
          %v446 = vld [vmem:[%s238 + $0x8] sm:$0xff]
          %v447 = vmul.f32 %v445, %v445
          %v448 = vmul.f32 %v446, %v446
          %449 = vadd.xlane.f32.xlu0 %v447
          %v450 = vpop.xlane.xlu0 %449
          %451 = vadd.xlane.f32.xlu0 %v448
          %v452 = vpop.xlane.xlu0 %451
          %v453 = vrsqrt.pop %v450
          %v454 = vrsqrt.pop %v452
          %v455 = vmul.f32 %v445, %v453
          %v456 = vmul.f32 %v446, %v454
          %v457 = vmul.f32 %v305, %v455
          %v458 = vmul.f32 %v306, %v456
          %459 = vadd.xlane.f32.xlu0 %v457
          %v460 = vpop.xlane.xlu0 %459
          %461 = vadd.xlane.f32.xlu0 %v458
          %v462 = vpop.xlane.xlu0 %461
          %s463 = sld [smem:[#allocation4 + $0x1]]
          %v464 = vsel %vm411, %v460, 0.0
          %v465 = vsel %vm411, %v462, 0.0
          %v466 = vadd.f32 %v464, %v465
          %467 = vadd.xlane.f32.xlu0 %v466
          %v468 = vpop.xlane.xlu0 %467
          %v469 = vrot.slane %v468, 4
          %v470 = vadd.f32 %v468, %v469
          %v471 = vrot.slane %v470, 2
          %v472 = vadd.f32 %v470, %v471
          %v473 = vrot.slane %v472, 1
          %v474 = vadd.f32 %v472, %v473
          %s475 = vtos %v474
          %s476 = sadd.f32 %s463, %s475
          %s477 = scalar_lea.smem [#allocation4], 1
          %478 = sst [smem:[%s477]] %s476
        $region60: #{tpu_custom_call.1} parent=31 // pred_fallthru
          _
        %p479 = scmp.eq.s32.totalorder %s26, 3
        // Predicated region
        $region61: #{tpu_custom_call.1} parent=31 // pred_check
          %p480 = pneg %p479
        $region62: #{tpu_custom_call.1} parent=31 // pred_check_branch
          %482 = sbr.rel (%p480) target = $region64
        $region63: #{tpu_custom_call.1} parent=31 // pred_region
          %s483 = sld [smem:[#allocation4]]
          %v484 = vld [vmem:[#allocation3] sm:$0xff]
          %v485 = vld [vmem:[#allocation3 + $0x8] sm:$0xff]
          %v486 = vlog2.pop %v484
          %v487 = vmul.f32 %v486, 0.6931472
          %v488 = vlog2.pop %v485
          %v489 = vmul.f32 %v488, 0.6931472
          %v490 = vsel %vm411, %v487, 0.0
          %v491 = vsel %vm411, %v489, 0.0
          %v492 = vadd.f32 %v490, %v491
          %493 = vadd.xlane.f32.xlu0 %v492
          %v494 = vpop.xlane.xlu0 %493
          %v495 = vrot.slane %v494, 4
          %v496 = vadd.f32 %v494, %v495
          %v497 = vrot.slane %v496, 2
          %v498 = vadd.f32 %v496, %v497
          %v499 = vrot.slane %v498, 1
          %v500 = vadd.f32 %v498, %v499
          %s501 = vtos %v500
          %s502 = sadd.f32 %s483, %s501
          %s503 = scalar_lea.smem [#allocation4], 0
          %504 = sst [smem:[%s503]] %s502
        $region64: #{tpu_custom_call.1} parent=31 // pred_fallthru
          _
        %p505 = scmp.eq.s32.totalorder %s25, 3
        %p506 = pnand %p505, %p479
        %p507 = pneg %p506
        // Predicated region
        $region65: #{tpu_custom_call.1} parent=31 // pred_check
          _
        $region66: #{tpu_custom_call.1} parent=31 // pred_check_branch
          %509 = sbr.rel (%p506) target = $region68
        $region67: #{tpu_custom_call.1} parent=31 // pred_region
          %s510 = sld [smem:[#allocation4]]
          %s511 = sld [smem:[#allocation4 + $0x1]]
          %s512 = sld [smem:[#allocation4 + $0x2]]
          %v513 = vld [vmem:[#allocation2] sm:$0x1]
          %v514 = vld [vmem:[#allocation2 + $0x1] sm:$0x1]
          %v515 = vld [vmem:[#allocation2 + $0x2] sm:$0x1]
          %v516 = vld [vmem:[#allocation2 + $0x3] sm:$0x1]
          %v517 = vlog2.pop %v513
          %v518 = vmul.f32 %v517, 0.6931472
          %v519 = vlog2.pop %v514
          %v520 = vmul.f32 %v519, 0.6931472
          %v521 = vlog2.pop %v515
          %v522 = vmul.f32 %v521, 0.6931472
          %v523 = vlog2.pop %v516
          %v524 = vmul.f32 %v523, 0.6931472
          %v525 = vsel %vm424, %v518, 0.0
          %v526 = vsel %vm424, %v520, 0.0
          %v527 = vadd.f32 %v525, %v526
          %v528 = vsel %vm424, %v522, 0.0
          %v529 = vadd.f32 %v527, %v528
          %v530 = vsel %vm424, %v524, 0.0
          %v531 = vadd.f32 %v529, %v530
          %532 = vadd.xlane.f32.xlu0 %v531
          %v533 = vpop.xlane.xlu0 %532
          %v534 = vrot.slane %v533, 4
          %v535 = vadd.f32 %v533, %v534
          %v536 = vrot.slane %v535, 2
          %v537 = vadd.f32 %v535, %v536
          %v538 = vrot.slane %v537, 1
          %v539 = vadd.f32 %v537, %v538
          %s540 = vtos %v539
          %s541 = sadd.f32 %s510, 640.0
          %s542 = smul.f32 %s511, 10.0
          %s543 = ssub.f32 %s541, %s542
          %s544 = sadd.f32 %s540, 640.0
          %s545 = ssub.f32 %s544, %s542
          %s546 = sadd.f32 %s543, %s545
          %s547 = smul.f32 %s546, 0.5
          %v548 = vrcp.pop 64.0
          %s549 = vtos %v548
          %s550 = smul.f32 %s547, %s549
          %s551 = scalar_lea.smem [#allocation11], 0
          %552 = sst [smem:[%s551]] %s550
          %v553 = vrcp.pop 64.0
          %s554 = vtos %v553
          %s555 = smul.f32 %s511, %s554
          %s556 = scalar_lea.smem [#allocation11], 1
          %557 = sst [smem:[%s556]] %s555
          %s558 = ssub.f32 %s512, %s511
          %v559 = vrcp.pop 4032.0
          %s560 = vtos %v559
          %s561 = smul.f32 %s558, %s560
          %s562 = scalar_lea.smem [#allocation11], 2
          %563 = sst [smem:[%s562]] %s561
        $region68: #{tpu_custom_call.1} parent=31 // pred_fallthru
          _
        // Predicated region
        $region69: #{tpu_custom_call.1} parent=31 // pred_check
          %p564 = pneg %p124
        $region70: #{tpu_custom_call.1} parent=31 // pred_check_branch
          %566 = sbr.rel (%p564) target = $region72
        $region71: #{tpu_custom_call.1} parent=31 // pred_region
          %s568 = ssub.s32 16, 16
          %569 = vsyncadd [#allocation7], %s568
          %572 = dma.smem_to_hbm [#allocation11], 16, %s3, [#allocation7]
        $region72: #{tpu_custom_call.1} parent=31 // pred_fallthru
          _
        // Predicated region
        $region73: #{tpu_custom_call.1} parent=31 // pred_check
          %p573 = pneg %p124
        $region74: #{tpu_custom_call.1} parent=31 // pred_check_branch
          %575 = sbr.rel (%p573) target = $region76
        $region75: #{tpu_custom_call.1} parent=31 // pred_region
          %576 = dma.done [#allocation7], 16
        $region76: #{tpu_custom_call.1} parent=31 // pred_fallthru
          _
        %577 = sfence
      $region32: #{tpu_custom_call.1} parent=5 // pred_fallthru
        _
      %p578 = scmp.le.s32.totalorder 2, %s16
      // Predicated region
      $region77: #{tpu_custom_call.1} parent=5 // pred_check
        %p579 = pneg %p578
      $region78: #{tpu_custom_call.1} parent=5 // pred_check_branch
        %581 = sbr.rel (%p579) target = $region80
      $region79: #{tpu_custom_call.1} parent=5 // pred_region
        %s582 = ssub.s32 %s16, 2
      $region80: #{tpu_custom_call.1} parent=5 // pred_fallthru
        _
    $region6: #{tpu_custom_call.1} parent=1 // loop_footer
      %s20 = sadd.s32 1, %s16
    $region7: #{tpu_custom_call.1} parent=1 // loop_footer_branch
      %15 = sbr.rel target = $region3
    $region8: #{tpu_custom_call.1} parent=1 // loop_exit
      _
    %583 = vsyncpa [#allocation6], 1
    %s584 = scalar_lea.sflag [#allocation6], 1
    %585 = vsyncpa %s584, 1
    %586 = vsyncpa [#allocation9], 1
    %s587 = scalar_lea.sflag [#allocation9], 1
    %588 = vsyncpa %s587, 1
    %589 = vsyncpa [#allocation7], 1
    %s590 = scalar_lea.sflag [#allocation7], 1
    %591 = vsyncpa %s590, 1

</llo_original>
